<compile_context>
chip_gen: v6e
topology: v6e:2x2x1
jax: 0.10.0
libtpu: 0.0.40
codegen_flags: <defaults>
</compile_context>

<pallas_src>
import jax
import jax.numpy as jnp
from jax.experimental import pallas as pl
from jax.experimental.pallas import tpu as pltpu


# ---------------------------------------------------------------------------
# Config (consistent with the module's constructor defaults)
# ---------------------------------------------------------------------------
M = 4                      # -> edge vector size 2*m + 3 = 11
EDGE_DIM = 2 * M + 3       # 11
EDGE_DIM_PAD = 16          # x lane-padded width fed to the kernel
HIDDEN_DIM = 32            # NodeRNN hidden size
MLP_HIDDEN = 32            # EdgeMLP hidden size (l2 uses MLP_HIDDEN // 2 = 16)
ENC_HIDDEN = 256           # InputEncoder hidden size (fixed in module)
NODE_RNN_INPUT_DIM = 32    # default in module
BATCH = 2

assert HIDDEN_DIM == MLP_HIDDEN == NODE_RNN_INPUT_DIM == 32
assert EDGE_DIM <= EDGE_DIM_PAD

# ---- packed parameter slab layout (built ONCE at init) ----
# enc slab: (16, 256) bf16 -- We1^T in rows 0..10, rows 11..15 zero.
ENC_ROWS = 16
# main slab: (128, 128) bf16, lane-dense.
MAIN_ROWS = 128
MAIN_W = 128
L_WE2_P0 = 0               # We2^T[  0:128, :] in lanes  0..31, rows 0..127
L_WE2_P1 = 32              # We2^T[128:256, :] in lanes 32..63, rows 0..127
L_A = 64                   # first 32-lane column of small matrices
L_B = 96                   # second 32-lane column of small matrices
RB_RNN = 0                 # rows  0..31 : Wih^T @ L_A, Whh^T @ L_B
RB_12 = 32                 # rows 32..63 : W1^T  @ L_A, W2^T (pad) @ L_B
RB_34 = 64                 # rows 64..95 : W3^T (pad) @ L_A, W4^T (pad) @ L_B
# bias slab: (8, 256) f32 (kept in f32 for accuracy; only 8 KiB).
BIAS_ROWS = 8
BR_E1, BR_E2, BR_RNN, BR_1, BR_2, BR_3, BR_4 = 0, 1, 2, 3, 4, 5, 6

OUT_W = 64                 # output slab: hidden in lanes 0..31, probs in 32..63
ROW_TILE = 256             # batch rows per grid step (marked "parallel")


def _leaky_relu(v, slope):
    return jnp.where(v >= 0, v, slope * v)


# ---------------------------------------------------------------------------
# Kernel: whole forward for one batch tile.
# ---------------------------------------------------------------------------
def automaton_rnn_kernel(x_ref, h_ref, enc_ref, wm_ref, b_ref, out_ref):
    f32, bf16 = jnp.float32, jnp.bfloat16
    x = x_ref[...].astype(bf16)            # (tb, 16)  lane-padded, pad lanes zero
    h0 = h_ref[...].astype(bf16)           # (tb, 32)

    # ---- h0 projection hoisted off the encoder critical path ----
    # h_proj = h0 @ Whh^T + (bih + bhh); overlaps with the encoder matmuls.
    whh = wm_ref[RB_RNN:RB_RNN + HIDDEN_DIM, L_B:L_B + HIDDEN_DIM]
    b_rnn = b_ref[BR_RNN:BR_RNN + 1, 0:HIDDEN_DIM]
    h_proj = jnp.dot(h0, whh, preferred_element_type=f32) + b_rnn

    # ---- InputEncoder: Linear -> leaky(0.01) -> Linear -> leaky(0.01) ----
    # Full (16,256) We1^T block; rows 11..15 are zero so the x pad lanes are inert.
    we1 = enc_ref[...]
    be1 = b_ref[BR_E1:BR_E1 + 1, :]
    e1 = _leaky_relu(jnp.dot(x, we1, preferred_element_type=f32) + be1, 0.01)
    e1 = e1.astype(bf16)                   # (tb, 256)

    # We2^T split along K into two 128-row panels (lane-dense packing).
    we2_p0 = wm_ref[:, L_WE2_P0:L_WE2_P0 + HIDDEN_DIM]   # (128, 32)
    we2_p1 = wm_ref[:, L_WE2_P1:L_WE2_P1 + HIDDEN_DIM]   # (128, 32)
    be2 = b_ref[BR_E2:BR_E2 + 1, 0:HIDDEN_DIM]
    pre2 = (jnp.dot(e1[:, 0:128], we2_p0, preferred_element_type=f32)
            + jnp.dot(e1[:, 128:256], we2_p1, preferred_element_type=f32))
    rnn_in = _leaky_relu(pre2 + be2, 0.01).astype(bf16)   # (tb, 32)

    # ---- NodeRNN single tanh step (no concat: h_proj precomputed above) ----
    wih = wm_ref[RB_RNN:RB_RNN + HIDDEN_DIM, L_A:L_A + HIDDEN_DIM]
    hidden = jnp.tanh(jnp.dot(rnn_in, wih, preferred_element_type=f32) + h_proj)
    out_ref[:, 0:HIDDEN_DIM] = hidden       # store hidden as soon as it is ready
    hb = hidden.astype(bf16)

    # ---- EdgeMLP (dropout identity at inference) ----
    # Narrow layers are zero-padded to 32 lanes; pad lanes stay exactly zero
    # through the +0 bias and leaky_relu, so valid lanes are unchanged.
    w1 = wm_ref[RB_12:RB_12 + HIDDEN_DIM, L_A:L_A + HIDDEN_DIM]
    b1 = b_ref[BR_1:BR_1 + 1, 0:HIDDEN_DIM]
    m1 = _leaky_relu(jnp.dot(hb, w1, preferred_element_type=f32) + b1, 0.01)
    m1 = m1.astype(bf16)

    w2 = wm_ref[RB_12:RB_12 + HIDDEN_DIM, L_B:L_B + HIDDEN_DIM]
    b2 = b_ref[BR_2:BR_2 + 1, 0:HIDDEN_DIM]
    m2 = _leaky_relu(jnp.dot(m1, w2, preferred_element_type=f32) + b2, 0.02)
    m2 = m2.astype(bf16)

    w3 = wm_ref[RB_34:RB_34 + HIDDEN_DIM, L_A:L_A + HIDDEN_DIM]
    b3 = b_ref[BR_3:BR_3 + 1, 0:HIDDEN_DIM]
    m3 = _leaky_relu(jnp.dot(m2, w3, preferred_element_type=f32) + b3, 0.02)
    m3 = m3.astype(bf16)

    w4 = wm_ref[RB_34:RB_34 + HIDDEN_DIM, L_B:L_B + HIDDEN_DIM]
    b4 = b_ref[BR_4:BR_4 + 1, 0:HIDDEN_DIM]
    probs = jax.nn.sigmoid(jnp.dot(m3, w4, preferred_element_type=f32) + b4)
    # NOTE: lanes 32+EDGE_DIM .. 63 of the output slab hold sigmoid(0)=0.5 (pad);
    # the wrapper slices them off -- nothing downstream may assume they are zero.
    out_ref[:, HIDDEN_DIM:HIDDEN_DIM + HIDDEN_DIM] = probs


# ---------------------------------------------------------------------------
# One-time parameter packing (transposes / fusion / padding hoisted out of forward)
# ---------------------------------------------------------------------------
def pack_params(p):
    bf16, f32 = jnp.bfloat16, jnp.float32

    enc = jnp.zeros((ENC_ROWS, ENC_HIDDEN), bf16)
    enc = enc.at[:EDGE_DIM, :].set(p["we1"].T.astype(bf16))

    we2t = p["we2"].T.astype(bf16)                          # (256, 32)
    main = jnp.zeros((MAIN_ROWS, MAIN_W), bf16)
    main = main.at[:, L_WE2_P0:L_WE2_P0 + 32].set(we2t[0:128])
    main = main.at[:, L_WE2_P1:L_WE2_P1 + 32].set(we2t[128:256])
    main = main.at[RB_RNN:RB_RNN + 32, L_A:L_A + 32].set(p["wih"].T.astype(bf16))
    main = main.at[RB_RNN:RB_RNN + 32, L_B:L_B + 32].set(p["whh"].T.astype(bf16))
    main = main.at[RB_12:RB_12 + 32, L_A:L_A + 32].set(p["w1"].T.astype(bf16))
    main = main.at[RB_12:RB_12 + 32, L_B:L_B + 16].set(p["w2"].T.astype(bf16))
    main = main.at[RB_34:RB_34 + 16, L_A:L_A + 32].set(p["w3"].T.astype(bf16))
    main = main.at[RB_34:RB_34 + 32, L_B:L_B + EDGE_DIM].set(p["w4"].T.astype(bf16))

    bias = jnp.zeros((BIAS_ROWS, ENC_HIDDEN), f32)
    bias = bias.at[BR_E1, :].set(p["be1"].astype(f32))
    bias = bias.at[BR_E2, 0:32].set(p["be2"].astype(f32))
    bias = bias.at[BR_RNN, 0:32].set((p["bih"] + p["bhh"]).astype(f32))
    bias = bias.at[BR_1, 0:32].set(p["b1"].astype(f32))
    bias = bias.at[BR_2, 0:16].set(p["b2"].astype(f32))
    bias = bias.at[BR_3, 0:32].set(p["b3"].astype(f32))
    bias = bias.at[BR_4, 0:EDGE_DIM].set(p["b4"].astype(f32))
    return {"enc": enc, "main": main, "bias": bias}


# ---------------------------------------------------------------------------
# Forward wrapper: pads batch to sublane multiples, tiles it over a "parallel"
# grid axis (second TensorCore on v7x), splits the packed output.
# ---------------------------------------------------------------------------
@jax.jit
def automaton_rnn_forward(x, h, packed):
    """x: (bs, 2m+3) f32; h: (1, bs, hidden) f32 (num_layers=1).
    Returns (edge_probs (bs, 2m+3), hidden (bs, hidden))."""
    bs = x.shape[0]
    h0 = h.reshape(bs, HIDDEN_DIM)

    pbs = ((bs + 7) // 8) * 8                  # pad batch to a sublane multiple
    if pbs > ROW_TILE:                         # tile large batches over the grid
        pbs = ((pbs + ROW_TILE - 1) // ROW_TILE) * ROW_TILE
        tb = ROW_TILE
    else:
        tb = pbs
    n_tiles = pbs // tb

    xp = jnp.zeros((pbs, EDGE_DIM_PAD), x.dtype).at[:bs, :EDGE_DIM].set(x)
    hp = h0 if pbs == bs else jnp.pad(h0, ((0, pbs - bs), (0, 0)))

    out = pl.pallas_call(
        automaton_rnn_kernel,
        out_shape=jax.ShapeDtypeStruct((pbs, OUT_W), jnp.float32),
        grid_spec=pltpu.PrefetchScalarGridSpec(
            num_scalar_prefetch=0,
            grid=(n_tiles,),
            in_specs=[
                pl.BlockSpec((tb, EDGE_DIM_PAD), lambda i: (i, 0)),
                pl.BlockSpec((tb, HIDDEN_DIM), lambda i: (i, 0)),
                pl.BlockSpec((ENC_ROWS, ENC_HIDDEN), lambda i: (0, 0)),
                pl.BlockSpec((MAIN_ROWS, MAIN_W), lambda i: (0, 0)),
                pl.BlockSpec((BIAS_ROWS, ENC_HIDDEN), lambda i: (0, 0)),
            ],
            out_specs=pl.BlockSpec((tb, OUT_W), lambda i: (i, 0)),
        ),
        compiler_params=pltpu.CompilerParams(
            dimension_semantics=("parallel",)),
    )(xp, hp, packed["enc"], packed["main"], packed["bias"])

    hidden = out[:bs, :HIDDEN_DIM]
    probs = out[:bs, HIDDEN_DIM:HIDDEN_DIM + EDGE_DIM]
    return probs, hidden


# ---------------------------------------------------------------------------
# Deterministic synthetic parameters (PyTorch-convention shapes) + reference
# ---------------------------------------------------------------------------
def init_params(key):
    def linear(key, out_f, in_f, scale=0.1):
        kw, kb = jax.random.split(key)
        w = scale * jax.random.normal(kw, (out_f, in_f), jnp.float32)
        b = scale * jax.random.normal(kb, (out_f,), jnp.float32)
        return w, b

    keys = jax.random.split(key, 9)
    p = {}
    p["we1"], p["be1"] = linear(keys[0], ENC_HIDDEN, EDGE_DIM)
    p["we2"], p["be2"] = linear(keys[1], NODE_RNN_INPUT_DIM, ENC_HIDDEN)
    p["wih"], p["bih"] = linear(keys[2], HIDDEN_DIM, NODE_RNN_INPUT_DIM)
    p["whh"], p["bhh"] = linear(keys[3], HIDDEN_DIM, HIDDEN_DIM)
    p["w1"], p["b1"] = linear(keys[4], MLP_HIDDEN, HIDDEN_DIM)
    p["w2"], p["b2"] = linear(keys[5], MLP_HIDDEN // 2, MLP_HIDDEN)
    p["w3"], p["b3"] = linear(keys[6], MLP_HIDDEN, MLP_HIDDEN // 2)
    p["w4"], p["b4"] = linear(keys[7], EDGE_DIM, MLP_HIDDEN)
    return p


def reference_forward(x, h, p):
    lr = _leaky_relu
    bs = x.shape[0]
    h0 = h.reshape(bs, HIDDEN_DIM)
    e1 = lr(x @ p["we1"].T + p["be1"], 0.01)
    rnn_in = lr(e1 @ p["we2"].T + p["be2"], 0.01)
    hidden = jnp.tanh(rnn_in @ p["wih"].T + p["bih"] + h0 @ p["whh"].T + p["bhh"])
    m1 = lr(hidden @ p["w1"].T + p["b1"], 0.01)
    m2 = lr(m1 @ p["w2"].T + p["b2"], 0.02)
    m3 = lr(m2 @ p["w3"].T + p["b3"], 0.02)
    return jax.nn.sigmoid(m3 @ p["w4"].T + p["b4"]), hidden


def _check(bs, k_data, params, packed, tol):
    kx, kh = jax.random.split(k_data)
    x = jax.random.normal(kx, (bs, EDGE_DIM), jnp.float32)
    h = 0.5 * jax.random.normal(kh, (1, bs, HIDDEN_DIM), jnp.float32)

    edge_probs, hidden = automaton_rnn_forward(x, h, packed)
    jax.block_until_ready((edge_probs, hidden))

    assert edge_probs.shape == (bs, EDGE_DIM)
    assert hidden.shape == (bs, HIDDEN_DIM)
    assert bool(jnp.all((edge_probs >= 0.0) & (edge_probs <= 1.0)))

    ref_probs, ref_hidden = reference_forward(x, h, params)
    assert bool(jnp.allclose(edge_probs, ref_probs, atol=tol, rtol=tol))
    assert bool(jnp.allclose(hidden, ref_hidden, atol=tol, rtol=tol))


if __name__ == "__main__":
    key = jax.random.PRNGKey(0)
    k_params, k_small, k_big = jax.random.split(key, 3)

    params = init_params(k_params)
    packed = pack_params(params)                    # one-time pack (hoisted out of forward)
    packed = jax.tree_util.tree_map(jax.block_until_ready, packed)

    # Small single-step check (module-like sizes: batch=2, m=4, hidden=32).
    # Tolerance is loose because the kernel (and default-precision MXU matmuls)
    # run bf16 operands with f32 accumulation.
    _check(BATCH, k_small, params, packed, tol=5e-3)

    # Larger-batch check exercising the tiled "parallel" batch grid (grid=(2,)).
    _check(512, k_big, params, packed, tol=5e-3)

    print("KERNEL_OK")
</pallas_src>

<mosaic_0001>
module attributes {stable_mosaic.version = 11 : i64} {
  func.func @automaton_rnn_kernel(%arg0: i32, %arg1: memref<8x16xf32, #tpu.memory_space<vmem>>, %arg2: memref<8x32xf32, #tpu.memory_space<vmem>>, %arg3: memref<16x256xbf16, #tpu.memory_space<vmem>>, %arg4: memref<128x128xbf16, #tpu.memory_space<vmem>>, %arg5: memref<8x256xf32, #tpu.memory_space<vmem>>, %arg6: memref<8x64xf32, #tpu.memory_space<vmem>>) attributes {dimension_semantics = [#tpu.dimension_semantics<parallel>], iteration_bounds = array<i64: 1>, scalar_prefetch = 0 : i64, scratch_operands = 0 : i64, tpu.core_type = #tpu.core_type<tc>, window_params = [{transform_indices = @transform_0, window_bounds = array<i64: 8, 16>}, {transform_indices = @transform_1, window_bounds = array<i64: 8, 32>}, {pipeline_mode = #tpu.pipeline_mode<synchronous>, transform_indices = @transform_2, window_bounds = array<i64: 16, 256>}, {pipeline_mode = #tpu.pipeline_mode<synchronous>, transform_indices = @transform_3, window_bounds = array<i64: 128, 128>}, {pipeline_mode = #tpu.pipeline_mode<synchronous>, transform_indices = @transform_4, window_bounds = array<i64: 8, 256>}, {transform_indices = @transform_5, window_bounds = array<i64: 8, 64>}]} {
    %c0 = arith.constant 0 : index
    %c0_0 = arith.constant 0 : index
    %0 = vector.load %arg1[%c0, %c0_0] : memref<8x16xf32, #tpu.memory_space<vmem>>, vector<8x16xf32>
    %1 = arith.truncf %0 : vector<8x16xf32> to vector<8x16xbf16>
    %c0_1 = arith.constant 0 : index
    %c0_2 = arith.constant 0 : index
    %2 = vector.load %arg2[%c0_1, %c0_2] : memref<8x32xf32, #tpu.memory_space<vmem>>, vector<8x32xf32>
    %3 = arith.truncf %2 : vector<8x32xf32> to vector<8x32xbf16>
    %c0_3 = arith.constant 0 : index
    %c96 = arith.constant 96 : index
    %4 = vector.load %arg4[%c0_3, %c96] : memref<128x128xbf16, #tpu.memory_space<vmem>>, vector<32x32xbf16>
    %c2 = arith.constant 2 : index
    %c0_4 = arith.constant 0 : index
    %5 = vector.load %arg5[%c2, %c0_4] : memref<8x256xf32, #tpu.memory_space<vmem>>, vector<1x32xf32>
    %cst = arith.constant dense<0.000000e+00> : vector<8x32xf32>
    %6 = tpu.matmul %3, %4, %cst {dimension_numbers = #tpu.dot_dimension_numbers<[1], [0], [0], [1], [0, 0, 1, 1], [], []>} : vector<8x32xbf16>, vector<32x32xbf16>, vector<8x32xf32> -> vector<8x32xf32>
    %7 = vector.broadcast %5 : vector<1x32xf32> to vector<8x32xf32>
    %8 = arith.addf %6, %7 : vector<8x32xf32>
    %c0_5 = arith.constant 0 : index
    %c0_6 = arith.constant 0 : index
    %9 = vector.load %arg3[%c0_5, %c0_6] : memref<16x256xbf16, #tpu.memory_space<vmem>>, vector<16x256xbf16>
    %c0_7 = arith.constant 0 : index
    %c0_8 = arith.constant 0 : index
    %10 = vector.load %arg5[%c0_7, %c0_8] : memref<8x256xf32, #tpu.memory_space<vmem>>, vector<1x256xf32>
    %cst_9 = arith.constant dense<0.000000e+00> : vector<8x256xf32>
    %11 = tpu.matmul %1, %9, %cst_9 {dimension_numbers = #tpu.dot_dimension_numbers<[1], [0], [0], [1], [0, 0, 1, 1], [], []>} : vector<8x16xbf16>, vector<16x256xbf16>, vector<8x256xf32> -> vector<8x256xf32>
    %12 = vector.broadcast %10 : vector<1x256xf32> to vector<8x256xf32>
    %13 = arith.addf %11, %12 : vector<8x256xf32>
    %cst_10 = arith.constant 0.000000e+00 : f32
    %14 = vector.broadcast %cst_10 : f32 to vector<8x256xf32>
    %15 = arith.cmpf oge, %13, %14 : vector<8x256xf32>
    %cst_11 = arith.constant 0.00999999977 : f32
    %16 = vector.broadcast %cst_11 : f32 to vector<8x256xf32>
    %17 = arith.mulf %16, %13 : vector<8x256xf32>
    %18 = arith.select %15, %13, %17 : vector<8x256xi1>, vector<8x256xf32>
    %19 = arith.truncf %18 : vector<8x256xf32> to vector<8x256xbf16>
    %c0_12 = arith.constant 0 : index
    %c0_13 = arith.constant 0 : index
    %20 = vector.load %arg4[%c0_12, %c0_13] : memref<128x128xbf16, #tpu.memory_space<vmem>>, vector<128x32xbf16>
    %c0_14 = arith.constant 0 : index
    %c32 = arith.constant 32 : index
    %21 = vector.load %arg4[%c0_14, %c32] : memref<128x128xbf16, #tpu.memory_space<vmem>>, vector<128x32xbf16>
    %c1 = arith.constant 1 : index
    %c0_15 = arith.constant 0 : index
    %22 = vector.load %arg5[%c1, %c0_15] : memref<8x256xf32, #tpu.memory_space<vmem>>, vector<1x32xf32>
    %23 = vector.extract_strided_slice %19 {offsets = [0, 0], sizes = [8, 128], strides = [1, 1]} : vector<8x256xbf16> to vector<8x128xbf16>
    %cst_16 = arith.constant dense<0.000000e+00> : vector<8x32xf32>
    %24 = tpu.matmul %23, %20, %cst_16 {dimension_numbers = #tpu.dot_dimension_numbers<[1], [0], [0], [1], [0, 0, 1, 1], [], []>} : vector<8x128xbf16>, vector<128x32xbf16>, vector<8x32xf32> -> vector<8x32xf32>
    %25 = vector.extract_strided_slice %19 {offsets = [0, 128], sizes = [8, 128], strides = [1, 1]} : vector<8x256xbf16> to vector<8x128xbf16>
    %cst_17 = arith.constant dense<0.000000e+00> : vector<8x32xf32>
    %26 = tpu.matmul %25, %21, %cst_17 {dimension_numbers = #tpu.dot_dimension_numbers<[1], [0], [0], [1], [0, 0, 1, 1], [], []>} : vector<8x128xbf16>, vector<128x32xbf16>, vector<8x32xf32> -> vector<8x32xf32>
    %27 = arith.addf %24, %26 : vector<8x32xf32>
    %28 = vector.broadcast %22 : vector<1x32xf32> to vector<8x32xf32>
    %29 = arith.addf %27, %28 : vector<8x32xf32>
    %cst_18 = arith.constant 0.000000e+00 : f32
    %30 = vector.broadcast %cst_18 : f32 to vector<8x32xf32>
    %31 = arith.cmpf oge, %29, %30 : vector<8x32xf32>
    %cst_19 = arith.constant 0.00999999977 : f32
    %32 = vector.broadcast %cst_19 : f32 to vector<8x32xf32>
    %33 = arith.mulf %32, %29 : vector<8x32xf32>
    %34 = arith.select %31, %29, %33 : vector<8x32xi1>, vector<8x32xf32>
    %35 = arith.truncf %34 : vector<8x32xf32> to vector<8x32xbf16>
    %c0_20 = arith.constant 0 : index
    %c64 = arith.constant 64 : index
    %36 = vector.load %arg4[%c0_20, %c64] : memref<128x128xbf16, #tpu.memory_space<vmem>>, vector<32x32xbf16>
    %cst_21 = arith.constant dense<0.000000e+00> : vector<8x32xf32>
    %37 = tpu.matmul %35, %36, %cst_21 {dimension_numbers = #tpu.dot_dimension_numbers<[1], [0], [0], [1], [0, 0, 1, 1], [], []>} : vector<8x32xbf16>, vector<32x32xbf16>, vector<8x32xf32> -> vector<8x32xf32>
    %38 = arith.addf %37, %8 : vector<8x32xf32>
    %39 = math.tanh %38 : vector<8x32xf32>
    %c0_22 = arith.constant 0 : index
    %c0_23 = arith.constant 0 : index
    %40 = vector.load %arg6[%c0_22, %c0_23] : memref<8x64xf32, #tpu.memory_space<vmem>>, vector<8x32xf32>
    tpu.vector_store %arg6[%c0_22, %c0_23], %39 {strides = array<i32>} : memref<8x64xf32, #tpu.memory_space<vmem>>, vector<8x32xf32>,
    %41 = arith.truncf %39 : vector<8x32xf32> to vector<8x32xbf16>
    %c32_24 = arith.constant 32 : index
    %c64_25 = arith.constant 64 : index
    %42 = vector.load %arg4[%c32_24, %c64_25] : memref<128x128xbf16, #tpu.memory_space<vmem>>, vector<32x32xbf16>
    %c3 = arith.constant 3 : index
    %c0_26 = arith.constant 0 : index
    %43 = vector.load %arg5[%c3, %c0_26] : memref<8x256xf32, #tpu.memory_space<vmem>>, vector<1x32xf32>
    %cst_27 = arith.constant dense<0.000000e+00> : vector<8x32xf32>
    %44 = tpu.matmul %41, %42, %cst_27 {dimension_numbers = #tpu.dot_dimension_numbers<[1], [0], [0], [1], [0, 0, 1, 1], [], []>} : vector<8x32xbf16>, vector<32x32xbf16>, vector<8x32xf32> -> vector<8x32xf32>
    %45 = vector.broadcast %43 : vector<1x32xf32> to vector<8x32xf32>
    %46 = arith.addf %44, %45 : vector<8x32xf32>
    %cst_28 = arith.constant 0.000000e+00 : f32
    %47 = vector.broadcast %cst_28 : f32 to vector<8x32xf32>
    %48 = arith.cmpf oge, %46, %47 : vector<8x32xf32>
    %cst_29 = arith.constant 0.00999999977 : f32
    %49 = vector.broadcast %cst_29 : f32 to vector<8x32xf32>
    %50 = arith.mulf %49, %46 : vector<8x32xf32>
    %51 = arith.select %48, %46, %50 : vector<8x32xi1>, vector<8x32xf32>
    %52 = arith.truncf %51 : vector<8x32xf32> to vector<8x32xbf16>
    %c32_30 = arith.constant 32 : index
    %c96_31 = arith.constant 96 : index
    %53 = vector.load %arg4[%c32_30, %c96_31] : memref<128x128xbf16, #tpu.memory_space<vmem>>, vector<32x32xbf16>
    %c4 = arith.constant 4 : index
    %c0_32 = arith.constant 0 : index
    %54 = vector.load %arg5[%c4, %c0_32] : memref<8x256xf32, #tpu.memory_space<vmem>>, vector<1x32xf32>
    %cst_33 = arith.constant dense<0.000000e+00> : vector<8x32xf32>
    %55 = tpu.matmul %52, %53, %cst_33 {dimension_numbers = #tpu.dot_dimension_numbers<[1], [0], [0], [1], [0, 0, 1, 1], [], []>} : vector<8x32xbf16>, vector<32x32xbf16>, vector<8x32xf32> -> vector<8x32xf32>
    %56 = vector.broadcast %54 : vector<1x32xf32> to vector<8x32xf32>
    %57 = arith.addf %55, %56 : vector<8x32xf32>
    %cst_34 = arith.constant 0.000000e+00 : f32
    %58 = vector.broadcast %cst_34 : f32 to vector<8x32xf32>
    %59 = arith.cmpf oge, %57, %58 : vector<8x32xf32>
    %cst_35 = arith.constant 2.000000e-02 : f32
    %60 = vector.broadcast %cst_35 : f32 to vector<8x32xf32>
    %61 = arith.mulf %60, %57 : vector<8x32xf32>
    %62 = arith.select %59, %57, %61 : vector<8x32xi1>, vector<8x32xf32>
    %63 = arith.truncf %62 : vector<8x32xf32> to vector<8x32xbf16>
    %c64_36 = arith.constant 64 : index
    %c64_37 = arith.constant 64 : index
    %64 = vector.load %arg4[%c64_36, %c64_37] : memref<128x128xbf16, #tpu.memory_space<vmem>>, vector<32x32xbf16>
    %c5 = arith.constant 5 : index
    %c0_38 = arith.constant 0 : index
    %65 = vector.load %arg5[%c5, %c0_38] : memref<8x256xf32, #tpu.memory_space<vmem>>, vector<1x32xf32>
    %cst_39 = arith.constant dense<0.000000e+00> : vector<8x32xf32>
    %66 = tpu.matmul %63, %64, %cst_39 {dimension_numbers = #tpu.dot_dimension_numbers<[1], [0], [0], [1], [0, 0, 1, 1], [], []>} : vector<8x32xbf16>, vector<32x32xbf16>, vector<8x32xf32> -> vector<8x32xf32>
    %67 = vector.broadcast %65 : vector<1x32xf32> to vector<8x32xf32>
    %68 = arith.addf %66, %67 : vector<8x32xf32>
    %cst_40 = arith.constant 0.000000e+00 : f32
    %69 = vector.broadcast %cst_40 : f32 to vector<8x32xf32>
    %70 = arith.cmpf oge, %68, %69 : vector<8x32xf32>
    %cst_41 = arith.constant 2.000000e-02 : f32
    %71 = vector.broadcast %cst_41 : f32 to vector<8x32xf32>
    %72 = arith.mulf %71, %68 : vector<8x32xf32>
    %73 = arith.select %70, %68, %72 : vector<8x32xi1>, vector<8x32xf32>
    %74 = arith.truncf %73 : vector<8x32xf32> to vector<8x32xbf16>
    %c64_42 = arith.constant 64 : index
    %c96_43 = arith.constant 96 : index
    %75 = vector.load %arg4[%c64_42, %c96_43] : memref<128x128xbf16, #tpu.memory_space<vmem>>, vector<32x32xbf16>
    %c6 = arith.constant 6 : index
    %c0_44 = arith.constant 0 : index
    %76 = vector.load %arg5[%c6, %c0_44] : memref<8x256xf32, #tpu.memory_space<vmem>>, vector<1x32xf32>
    %cst_45 = arith.constant dense<0.000000e+00> : vector<8x32xf32>
    %77 = tpu.matmul %74, %75, %cst_45 {dimension_numbers = #tpu.dot_dimension_numbers<[1], [0], [0], [1], [0, 0, 1, 1], [], []>} : vector<8x32xbf16>, vector<32x32xbf16>, vector<8x32xf32> -> vector<8x32xf32>
    %78 = vector.broadcast %76 : vector<1x32xf32> to vector<8x32xf32>
    %79 = arith.addf %77, %78 : vector<8x32xf32>
    %80 = arith.negf %79 : vector<8x32xf32>
    %81 = math.exp %80 : vector<8x32xf32>
    %cst_46 = arith.constant 1.000000e+00 : f32
    %82 = vector.broadcast %cst_46 : f32 to vector<8x32xf32>
    %83 = arith.addf %82, %81 : vector<8x32xf32>
    %84 = arith.divf %82, %83 : vector<8x32xf32>
    %c0_47 = arith.constant 0 : index
    %c32_48 = arith.constant 32 : index
    %85 = vector.load %arg6[%c0_47, %c32_48] : memref<8x64xf32, #tpu.memory_space<vmem>>, vector<8x32xf32>
    tpu.vector_store %arg6[%c0_47, %c32_48], %84 {strides = array<i32>} : memref<8x64xf32, #tpu.memory_space<vmem>>, vector<8x32xf32>,
    return
  }
  func.func @transform_0(%arg0: i32) -> (i32, i32) {
    %c0_i32 = arith.constant 0 : i32
    %c0_i32_0 = arith.constant 0 : i32
    return %arg0, %c0_i32 : i32, i32
  }
  func.func @transform_1(%arg0: i32) -> (i32, i32) {
    %c0_i32 = arith.constant 0 : i32
    %c0_i32_0 = arith.constant 0 : i32
    return %arg0, %c0_i32 : i32, i32
  }
  func.func @transform_2(%arg0: i32) -> (i32, i32) {
    %c0_i32 = arith.constant 0 : i32
    %c0_i32_0 = arith.constant 0 : i32
    %c0_i32_1 = arith.constant 0 : i32
    return %c0_i32, %c0_i32_0 : i32, i32
  }
  func.func @transform_3(%arg0: i32) -> (i32, i32) {
    %c0_i32 = arith.constant 0 : i32
    %c0_i32_0 = arith.constant 0 : i32
    %c0_i32_1 = arith.constant 0 : i32
    return %c0_i32, %c0_i32_0 : i32, i32
  }
  func.func @transform_4(%arg0: i32) -> (i32, i32) {
    %c0_i32 = arith.constant 0 : i32
    %c0_i32_0 = arith.constant 0 : i32
    %c0_i32_1 = arith.constant 0 : i32
    return %c0_i32, %c0_i32_0 : i32, i32
  }
  func.func @transform_5(%arg0: i32) -> (i32, i32) {
    %c0_i32 = arith.constant 0 : i32
    %c0_i32_0 = arith.constant 0 : i32
    return %arg0, %c0_i32 : i32, i32
  }
}

</mosaic_0001>

<llo_original>
// kernel: automaton_rnn_forward.1
$region0: #{automaton_rnn_forward.1}
  #allocation0 [shape = 'u32[]', space=smem, size = 0x4, offset = 0x4, fixed_abs, tag = 'smem constant byte address 0x4 - core index']
  #allocation1 [shape = 'u32[144,128]{1,0:T(1,128)}', space=vmem, size = 0x12000, scoped, tag = 'internal scratch']
  %s0 = inlined_call_operand.vmem [shape: f32[8,16], index: 0, kind: input, shape index: {}]
  %s1 = inlined_call_operand.vmem [shape: f32[8,32], index: 1, kind: input, shape index: {}]
  %s2 = inlined_call_operand.vmem [shape: bf16[16,256], index: 2, kind: input, shape index: {}]
  %s3 = inlined_call_operand.hbm [shape: bf16[128,128], index: 3, kind: input, shape index: {}]
  %s4 = inlined_call_operand.hbm [shape: f32[8,256], index: 4, kind: input, shape index: {}]
  %s5 = inlined_call_operand.vmem [shape: f32[8,64], index: 5, kind: output, shape index: {}]
  %s6 = sld [smem:[#allocation0]]
  $region38: #{automaton_rnn_forward.1} parent=0
    _
  %s8 = ssub.s32 1, %s6
  %s9 = scalar_select 0, %s8, %s6
  $region1: #{automaton_rnn_forward.1} parent=0
    #allocation2 [shape = 'u8[32768]{0}', space=vmem, size = 0x8000, scoped, tag = 'input window, operand 3, single buffered']
    #allocation3 [shape = 's32[1]{0}', space=sflag, size = 0x4, scoped, tag = 'scoped memory for automaton_rnn_forward.1']
    #allocation4 [shape = 'u8[8192]{0}', space=vmem, size = 0x2000, scoped, tag = 'input window, operand 4, single buffered']
    #allocation5 [shape = 's32[1]{0}', space=sflag, size = 0x4, scoped, tag = 'scoped memory for automaton_rnn_forward.1']
    %10 = vsyncpa [#allocation3], 0
    %11 = vsyncpa [#allocation5], 0
    // Predicated region
    $region2: #{automaton_rnn_forward.1} parent=1 // pred_check
      _
    $region3: #{automaton_rnn_forward.1} parent=1 // pred_check_branch
      %13 = sbr.rel (0) target = $region5
    $region4: #{automaton_rnn_forward.1} parent=1 // pred_region
      _
    $region5: #{automaton_rnn_forward.1} parent=1 // pred_fallthru
      _
    // Predicated region
    $region6: #{automaton_rnn_forward.1} parent=1 // pred_check
      _
    $region7: #{automaton_rnn_forward.1} parent=1 // pred_check_branch
      %15 = sbr.rel (0) target = $region9
    $region8: #{automaton_rnn_forward.1} parent=1 // pred_region
      _
    $region9: #{automaton_rnn_forward.1} parent=1 // pred_fallthru
      _
    // Predicated region
    $region10: #{automaton_rnn_forward.1} parent=1 // pred_check
      _
    $region11: #{automaton_rnn_forward.1} parent=1 // pred_check_branch
      %17 = sbr.rel (0) target = $region13
    $region12: #{automaton_rnn_forward.1} parent=1 // pred_region
      _
    $region13: #{automaton_rnn_forward.1} parent=1 // pred_fallthru
      _
    // Predicated region
    $region14: #{automaton_rnn_forward.1} parent=1 // pred_check
      _
    $region15: #{automaton_rnn_forward.1} parent=1 // pred_check_branch
      %19 = sbr.rel (0) target = $region17
    $region16: #{automaton_rnn_forward.1} parent=1 // pred_region
      %s21 = ssub.s32 1024, 1024
      %22 = vsyncadd [#allocation3], %s21
      %s23 = sshll.u32 [#allocation2], 4
      %s24 = int_to_ptr.vmem [resolvable:$true] %s23
      %29 = dma.hbm_to_vmem [thread:$0]  %s3, 1024, %s24, [#allocation3], 64, 64, 4
    $region17: #{automaton_rnn_forward.1} parent=1 // pred_fallthru
      _
    // Predicated region
    $region18: #{automaton_rnn_forward.1} parent=1 // pred_check
      _
    $region19: #{automaton_rnn_forward.1} parent=1 // pred_check_branch
      %31 = sbr.rel (0) target = $region21
    $region20: #{automaton_rnn_forward.1} parent=1 // pred_region
      %s33 = ssub.s32 256, 256
      %34 = vsyncadd [#allocation5], %s33
      %s36 = sshll.u32 [#allocation4], 4
      %s37 = int_to_ptr.vmem [resolvable:$true] %s36
      %39 = dma.hbm_to_vmem [thread:$0]  %s4, 256, %s37, [#allocation5]
    $region21: #{automaton_rnn_forward.1} parent=1 // pred_fallthru
      _
    // Predicated region
    $region22: #{automaton_rnn_forward.1} parent=1 // pred_check
      _
    $region23: #{automaton_rnn_forward.1} parent=1 // pred_check_branch
      %41 = sbr.rel (0) target = $region25
    $region24: #{automaton_rnn_forward.1} parent=1 // pred_region
      %42 = dma.done [#allocation3], 1024
    $region25: #{automaton_rnn_forward.1} parent=1 // pred_fallthru
      _
    // Predicated region
    $region26: #{automaton_rnn_forward.1} parent=1 // pred_check
      _
    $region27: #{automaton_rnn_forward.1} parent=1 // pred_check_branch
      %44 = sbr.rel (0) target = $region29
    $region28: #{automaton_rnn_forward.1} parent=1 // pred_region
      %45 = dma.done [#allocation5], 256
    $region29: #{automaton_rnn_forward.1} parent=1 // pred_fallthru
      _
    %v47 = vld [vmem:[%s0] sm:$0xff]
    %v48 = vpack.c.bf16 %v47, %v47
    %v49 = vld [vmem:[%s1] sm:$0xff]
    %v50 = vpack.c.bf16 %v49, %v49
    %v51 = vld [vmem:[#allocation2] sm:$0xf]
    %v52 = vld [vmem:[#allocation2 + $0x4] sm:$0xf]
    %v53 = vld [vmem:[#allocation2 + $0x8] sm:$0xf]
    %v54 = vld [vmem:[#allocation2 + $0xc] sm:$0xf]
    %v55 = vld [vmem:[#allocation4 + $0x2] ss:$0 sm:$0xff]
    %v60 = vunpack.c.l.b16 %v51
    %v61 = vunpack.c.l.b16 %v52
    %v62 = vunpack.c.l.b16 %v53
    %v63 = vunpack.c.l.b16 %v54
    %v64 = vpack.c.b16 %v61, %v60
    %v65 = vpack.c.b16 %v63, %v62
    %66 = vrot.lane.b32.xlu0 %v64, 32
    %v67 = vpop.permute.xlu0 %66
    %68 = vrot.lane.b32.xlu0 %v65, 32
    %v69 = vpop.permute.xlu0 %68
    %vm72 = vcmask 261120
    %v74 = vsel %vm72, %v50, 0
    %76 = vmatprep.subr.bf16.mxu0 0
    %77 = vmatpush1.bf16.msra.mxu0 0
    %78 = vmatprep.subr.bf16.mxu0 0
    %79 = vmatpush1.bf16.msra.mxu0 0
    %80 = vmatprep.subr.bf16.mxu0 0
    %81 = vmatpush1.bf16.msra.mxu0 0
    %82 = vmatprep.subr.bf16.mxu0 0
    %83 = vmatpush1.bf16.msra.mxu0 0
    %84 = vmatprep.subr.bf16.mxu0 0
    %85 = vmatpush1.bf16.msra.mxu0 0
    %86 = vmatprep.subr.bf16.mxu0 0
    %87 = vmatpush1.bf16.msra.mxu0 0
    %88 = vmatprep.subr.bf16.mxu0 0
    %89 = vmatpush1.bf16.msra.mxu0 %v69
    %90 = vmatprep.subr.bf16.mxu0 0
    %91 = vmatpush1.bf16.msra.mxu0 %v67
    %92 = vmatprep.subr.bf16.mxu0 0
    %93 = vmatpush2.bf16.msra.mxu0 0
    %94 = vmatprep.subr.bf16.mxu0 0
    %95 = vmatpush2.bf16.msra.mxu0 0
    %96 = vmatprep.subr.bf16.mxu0 0
    %97 = vmatpush2.bf16.msra.mxu0 0
    %98 = vmatprep.subr.bf16.mxu0 0
    %99 = vmatpush2.bf16.msra.mxu0 0
    %100 = vmatprep.subr.bf16.mxu0 0
    %101 = vmatpush2.bf16.msra.mxu0 0
    %102 = vmatprep.subr.bf16.mxu0 0
    %103 = vmatpush2.bf16.msra.mxu0 0
    %104 = vmatprep.subr.bf16.mxu0 0
    %105 = vmatpush2.bf16.msra.mxu0 0
    %106 = vmatprep.subr.bf16.mxu0 0
    %107 = vmatpush2.bf16.msra.mxu0 0
    %108 = vmatprep.mubr.bf16.mxu0 0
    %109 = vmatmul.mubr.bf16.gmra.mxu0 %v74
    %v110 = vpop.f32.mrf.mxu0
    %v111 = vadd.f32 %v55, %v110
    %v112 = vpop.f32.mrf.mxu0
    %v113 = vpop.f32.mrf.mxu0
    %v114 = vpop.f32.mrf.mxu0
    %115 = vdwg.mxu0
    %v116 = vld [vmem:[%s2] sm:$0xff]
    %v117 = vld [vmem:[%s2 + $0x8] sm:$0xff]
    %v118 = vld [vmem:[#allocation4] ss:$8 sm:$0x3]
    %v120 = vlaneseq
    %v121 = vshrl.u32 %v120, 7
    %v122 = vsub.s32 0, %v121
    %v123 = vrot.slane %v118, %v122
    %v124 = vlaneseq
    %v125 = vshrl.u32 %v124, 7
    %v126 = vsub.s32 1, %v125
    %v127 = vrot.slane %v118, %v126
    %v132 = vunpack.c.l.b16 %v116
    %v133 = vunpack.c.h.b16 %v116
    %v134 = vunpack.c.l.b16 %v117
    %v135 = vunpack.c.h.b16 %v117
    %v136 = vpack.c.b16 %v134, %v132
    %v137 = vpack.c.b16 %v135, %v133
    %vm140 = vcmask 130048
    %v142 = vsel %vm140, %v48, 0
    %144 = vmatprep.subr.bf16.mxu0 0
    %145 = vmatpush1.bf16.msra.mxu0 0
    %146 = vmatprep.subr.bf16.mxu0 0
    %147 = vmatpush1.bf16.msra.mxu0 0
    %148 = vmatprep.subr.bf16.mxu0 0
    %149 = vmatpush1.bf16.msra.mxu0 0
    %150 = vmatprep.subr.bf16.mxu0 0
    %151 = vmatpush1.bf16.msra.mxu0 0
    %152 = vmatprep.subr.bf16.mxu0 0
    %153 = vmatpush1.bf16.msra.mxu0 0
    %154 = vmatprep.subr.bf16.mxu0 0
    %155 = vmatpush1.bf16.msra.mxu0 0
    %156 = vmatprep.subr.bf16.mxu0 0
    %157 = vmatpush1.bf16.msra.mxu0 0
    %158 = vmatprep.subr.bf16.mxu0 %v137
    %159 = vmatpush1.bf16.msra.mxu0 %v136
    %160 = vmatprep.subr.bf16.mxu0 0
    %161 = vmatpush2.bf16.msra.mxu0 0
    %162 = vmatprep.subr.bf16.mxu0 0
    %163 = vmatpush2.bf16.msra.mxu0 0
    %164 = vmatprep.subr.bf16.mxu0 0
    %165 = vmatpush2.bf16.msra.mxu0 0
    %166 = vmatprep.subr.bf16.mxu0 0
    %167 = vmatpush2.bf16.msra.mxu0 0
    %168 = vmatprep.subr.bf16.mxu0 0
    %169 = vmatpush2.bf16.msra.mxu0 0
    %170 = vmatprep.subr.bf16.mxu0 0
    %171 = vmatpush2.bf16.msra.mxu0 0
    %172 = vmatprep.subr.bf16.mxu0 0
    %173 = vmatpush2.bf16.msra.mxu0 0
    %174 = vmatprep.subr.bf16.mxu0 0
    %175 = vmatpush2.bf16.msra.mxu0 0
    %176 = vmatprep.mubr.bf16.mxu0 0
    %177 = vmatmul.mubr.bf16.gmra.mxu0 %v142
    %v178 = vpop.f32.mrf.mxu0
    %v179 = vadd.f32 %v123, %v178
    %v180 = vpop.f32.mrf.mxu0
    %v181 = vadd.f32 %v127, %v180
    %v182 = vpop.f32.mrf.mxu0
    %v183 = vpop.f32.mrf.mxu0
    %184 = vdwg.mxu0
    %vm185 = vcmp.ge.f32.partialorder %v179, 0.0
    %vm186 = vcmp.ge.f32.partialorder %v181, 0.0
    %v187 = vmul.f32 %v179, 0.01
    %v188 = vmul.f32 %v181, 0.01
    %v189 = vsel %vm185, %v179, %v187
    %v190 = vsel %vm186, %v181, %v188
    %v191 = vpack.c.bf16 %v189, %v189
    %v192 = vpack.c.bf16 %v190, %v190
    %v193 = vld [vmem:[#allocation2] sm:$0xf]
    %v194 = vld [vmem:[#allocation2 + $0x4] sm:$0xf]
    %v195 = vld [vmem:[#allocation2 + $0x8] sm:$0xf]
    %v196 = vld [vmem:[#allocation2 + $0xc] sm:$0xf]
    %v197 = vld [vmem:[#allocation2 + $0x10] sm:$0xf]
    %v198 = vld [vmem:[#allocation2 + $0x14] sm:$0xf]
    %v199 = vld [vmem:[#allocation2 + $0x18] sm:$0xf]
    %v200 = vld [vmem:[#allocation2 + $0x1c] sm:$0xf]
    %v201 = vld [vmem:[#allocation2 + $0x20] sm:$0xf]
    %v202 = vld [vmem:[#allocation2 + $0x24] sm:$0xf]
    %v203 = vld [vmem:[#allocation2 + $0x28] sm:$0xf]
    %v204 = vld [vmem:[#allocation2 + $0x2c] sm:$0xf]
    %v205 = vld [vmem:[#allocation2 + $0x30] sm:$0xf]
    %v206 = vld [vmem:[#allocation2 + $0x34] sm:$0xf]
    %v207 = vld [vmem:[#allocation2 + $0x38] sm:$0xf]
    %v208 = vld [vmem:[#allocation2 + $0x3c] sm:$0xf]
    %v209 = vld [vmem:[#allocation4 + $0x1] ss:$0 sm:$0xff]
    %v226 = vunpack.c.l.b16 %v193
    %v227 = vunpack.c.l.b16 %v194
    %v228 = vunpack.c.l.b16 %v195
    %v229 = vunpack.c.l.b16 %v196
    %v230 = vunpack.c.l.b16 %v197
    %v231 = vunpack.c.l.b16 %v198
    %v232 = vunpack.c.l.b16 %v199
    %v233 = vunpack.c.l.b16 %v200
    %v234 = vunpack.c.l.b16 %v201
    %v235 = vunpack.c.l.b16 %v202
    %v236 = vunpack.c.l.b16 %v203
    %v237 = vunpack.c.l.b16 %v204
    %v238 = vunpack.c.l.b16 %v205
    %v239 = vunpack.c.l.b16 %v206
    %v240 = vunpack.c.l.b16 %v207
    %v241 = vunpack.c.l.b16 %v208
    %v242 = vpack.c.b16 %v227, %v226
    %v243 = vpack.c.b16 %v229, %v228
    %v244 = vpack.c.b16 %v231, %v230
    %v245 = vpack.c.b16 %v233, %v232
    %v246 = vpack.c.b16 %v235, %v234
    %v247 = vpack.c.b16 %v237, %v236
    %v248 = vpack.c.b16 %v239, %v238
    %v249 = vpack.c.b16 %v241, %v240
    %250 = vrot.lane.b32.xlu0 %v242, 96
    %v251 = vpop.permute.xlu0 %250
    %252 = vrot.lane.b32.xlu0 %v243, 96
    %v253 = vpop.permute.xlu0 %252
    %254 = vrot.lane.b32.xlu0 %v244, 96
    %v255 = vpop.permute.xlu0 %254
    %256 = vrot.lane.b32.xlu0 %v245, 96
    %v257 = vpop.permute.xlu0 %256
    %258 = vrot.lane.b32.xlu0 %v246, 96
    %v259 = vpop.permute.xlu0 %258
    %260 = vrot.lane.b32.xlu0 %v247, 96
    %v261 = vpop.permute.xlu0 %260
    %262 = vrot.lane.b32.xlu0 %v248, 96
    %v263 = vpop.permute.xlu0 %262
    %264 = vrot.lane.b32.xlu0 %v249, 96
    %v265 = vpop.permute.xlu0 %264
    %274 = vmatprep.subr.bf16.mxu0 0
    %275 = vmatpush1.bf16.msra.mxu0 %v265
    %276 = vmatprep.subr.bf16.mxu0 0
    %277 = vmatpush1.bf16.msra.mxu0 %v263
    %278 = vmatprep.subr.bf16.mxu0 0
    %279 = vmatpush1.bf16.msra.mxu0 %v261
    %280 = vmatprep.subr.bf16.mxu0 0
    %281 = vmatpush1.bf16.msra.mxu0 %v259
    %282 = vmatprep.subr.bf16.mxu0 0
    %283 = vmatpush1.bf16.msra.mxu0 %v257
    %284 = vmatprep.subr.bf16.mxu0 0
    %285 = vmatpush1.bf16.msra.mxu0 %v255
    %286 = vmatprep.subr.bf16.mxu0 0
    %287 = vmatpush1.bf16.msra.mxu0 %v253
    %288 = vmatprep.subr.bf16.mxu0 0
    %289 = vmatpush1.bf16.msra.mxu0 %v251
    %290 = vmatprep.subr.bf16.mxu0 0
    %291 = vmatpush2.bf16.msra.mxu0 0
    %292 = vmatprep.subr.bf16.mxu0 0
    %293 = vmatpush2.bf16.msra.mxu0 0
    %294 = vmatprep.subr.bf16.mxu0 0
    %295 = vmatpush2.bf16.msra.mxu0 0
    %296 = vmatprep.subr.bf16.mxu0 0
    %297 = vmatpush2.bf16.msra.mxu0 0
    %298 = vmatprep.subr.bf16.mxu0 0
    %299 = vmatpush2.bf16.msra.mxu0 0
    %300 = vmatprep.subr.bf16.mxu0 0
    %301 = vmatpush2.bf16.msra.mxu0 0
    %302 = vmatprep.subr.bf16.mxu0 0
    %303 = vmatpush2.bf16.msra.mxu0 0
    %304 = vmatprep.subr.bf16.mxu0 0
    %305 = vmatpush2.bf16.msra.mxu0 0
    %306 = vmatprep.mubr.bf16.mxu0 0
    %307 = vmatmul.mubr.bf16.gmra.mxu0 %v192
    %v308 = vpop.f32.mrf.mxu0
    %v309 = vadd.f32 0.0, %v308
    %v310 = vpop.f32.mrf.mxu0
    %v311 = vpop.f32.mrf.mxu0
    %v312 = vpop.f32.mrf.mxu0
    %313 = vdwg.mxu0
    %322 = vmatprep.subr.bf16.mxu0 0
    %323 = vmatpush1.bf16.msra.mxu0 %v249
    %324 = vmatprep.subr.bf16.mxu0 0
    %325 = vmatpush1.bf16.msra.mxu0 %v248
    %326 = vmatprep.subr.bf16.mxu0 0
    %327 = vmatpush1.bf16.msra.mxu0 %v247
    %328 = vmatprep.subr.bf16.mxu0 0
    %329 = vmatpush1.bf16.msra.mxu0 %v246
    %330 = vmatprep.subr.bf16.mxu0 0
    %331 = vmatpush1.bf16.msra.mxu0 %v245
    %332 = vmatprep.subr.bf16.mxu0 0
    %333 = vmatpush1.bf16.msra.mxu0 %v244
    %334 = vmatprep.subr.bf16.mxu0 0
    %335 = vmatpush1.bf16.msra.mxu0 %v243
    %336 = vmatprep.subr.bf16.mxu0 0
    %337 = vmatpush1.bf16.msra.mxu0 %v242
    %338 = vmatprep.subr.bf16.mxu0 0
    %339 = vmatpush2.bf16.msra.mxu0 0
    %340 = vmatprep.subr.bf16.mxu0 0
    %341 = vmatpush2.bf16.msra.mxu0 0
    %342 = vmatprep.subr.bf16.mxu0 0
    %343 = vmatpush2.bf16.msra.mxu0 0
    %344 = vmatprep.subr.bf16.mxu0 0
    %345 = vmatpush2.bf16.msra.mxu0 0
    %346 = vmatprep.subr.bf16.mxu0 0
    %347 = vmatpush2.bf16.msra.mxu0 0
    %348 = vmatprep.subr.bf16.mxu0 0
    %349 = vmatpush2.bf16.msra.mxu0 0
    %350 = vmatprep.subr.bf16.mxu0 0
    %351 = vmatpush2.bf16.msra.mxu0 0
    %352 = vmatprep.subr.bf16.mxu0 0
    %353 = vmatpush2.bf16.msra.mxu0 0
    %354 = vmatprep.mubr.bf16.mxu0 0
    %355 = vmatmul.mubr.bf16.gmra.mxu0 %v191
    %v356 = vpop.f32.mrf.mxu0
    %v357 = vadd.f32 %v309, %v356
    %v358 = vpop.f32.mrf.mxu0
    %v359 = vpop.f32.mrf.mxu0
    %v360 = vpop.f32.mrf.mxu0
    %361 = vdwg.mxu0
    %v362 = vadd.f32 %v357, %v209
    %vm363 = vcmp.ge.f32.partialorder %v362, 0.0
    %v364 = vmul.f32 %v362, 0.01
    %v365 = vsel %vm363, %v362, %v364
    %v366 = vpack.c.bf16 %v365, %v365
    %367 = vrot.lane.b32.xlu0 %v64, 64
    %v368 = vpop.permute.xlu0 %367
    %369 = vrot.lane.b32.xlu0 %v65, 64
    %v370 = vpop.permute.xlu0 %369
    %v374 = vsel %vm72, %v366, 0
    %376 = vmatprep.subr.bf16.mxu0 0
    %377 = vmatpush1.bf16.msra.mxu0 0
    %378 = vmatprep.subr.bf16.mxu0 0
    %379 = vmatpush1.bf16.msra.mxu0 0
    %380 = vmatprep.subr.bf16.mxu0 0
    %381 = vmatpush1.bf16.msra.mxu0 0
    %382 = vmatprep.subr.bf16.mxu0 0
    %383 = vmatpush1.bf16.msra.mxu0 0
    %384 = vmatprep.subr.bf16.mxu0 0
    %385 = vmatpush1.bf16.msra.mxu0 0
    %386 = vmatprep.subr.bf16.mxu0 0
    %387 = vmatpush1.bf16.msra.mxu0 0
    %388 = vmatprep.subr.bf16.mxu0 0
    %389 = vmatpush1.bf16.msra.mxu0 %v370
    %390 = vmatprep.subr.bf16.mxu0 0
    %391 = vmatpush1.bf16.msra.mxu0 %v368
    %392 = vmatprep.subr.bf16.mxu0 0
    %393 = vmatpush2.bf16.msra.mxu0 0
    %394 = vmatprep.subr.bf16.mxu0 0
    %395 = vmatpush2.bf16.msra.mxu0 0
    %396 = vmatprep.subr.bf16.mxu0 0
    %397 = vmatpush2.bf16.msra.mxu0 0
    %398 = vmatprep.subr.bf16.mxu0 0
    %399 = vmatpush2.bf16.msra.mxu0 0
    %400 = vmatprep.subr.bf16.mxu0 0
    %401 = vmatpush2.bf16.msra.mxu0 0
    %402 = vmatprep.subr.bf16.mxu0 0
    %403 = vmatpush2.bf16.msra.mxu0 0
    %404 = vmatprep.subr.bf16.mxu0 0
    %405 = vmatpush2.bf16.msra.mxu0 0
    %406 = vmatprep.subr.bf16.mxu0 0
    %407 = vmatpush2.bf16.msra.mxu0 0
    %408 = vmatprep.mubr.bf16.mxu0 0
    %409 = vmatmul.mubr.bf16.gmra.mxu0 %v374
    %v410 = vpop.f32.mrf.mxu0
    %v411 = vadd.f32 %v111, %v410
    %v412 = vpop.f32.mrf.mxu0
    %v413 = vpop.f32.mrf.mxu0
    %v414 = vpop.f32.mrf.mxu0
    %415 = vdwg.mxu0
    %v416 = vtanh.pop %v411
    %417 = vst.msk [vmem:[%s5] sm:$0xff] %vm72, %v416
    %v418 = vpack.c.bf16 %v416, %v416
    %v419 = vld [vmem:[#allocation2 + $0x10] sm:$0xf]
    %v420 = vld [vmem:[#allocation2 + $0x14] sm:$0xf]
    %v421 = vld [vmem:[#allocation2 + $0x18] sm:$0xf]
    %v422 = vld [vmem:[#allocation2 + $0x1c] sm:$0xf]
    %v423 = vld [vmem:[#allocation4 + $0x3] ss:$0 sm:$0xff]
    %v428 = vunpack.c.l.b16 %v419
    %v429 = vunpack.c.l.b16 %v420
    %v430 = vunpack.c.l.b16 %v421
    %v431 = vunpack.c.l.b16 %v422
    %v432 = vpack.c.b16 %v429, %v428
    %v433 = vpack.c.b16 %v431, %v430
    %434 = vrot.lane.b32.xlu0 %v432, 64
    %v435 = vpop.permute.xlu0 %434
    %436 = vrot.lane.b32.xlu0 %v433, 64
    %v437 = vpop.permute.xlu0 %436
    %v441 = vsel %vm72, %v418, 0
    %443 = vmatprep.subr.bf16.mxu0 0
    %444 = vmatpush1.bf16.msra.mxu0 0
    %445 = vmatprep.subr.bf16.mxu0 0
    %446 = vmatpush1.bf16.msra.mxu0 0
    %447 = vmatprep.subr.bf16.mxu0 0
    %448 = vmatpush1.bf16.msra.mxu0 0
    %449 = vmatprep.subr.bf16.mxu0 0
    %450 = vmatpush1.bf16.msra.mxu0 0
    %451 = vmatprep.subr.bf16.mxu0 0
    %452 = vmatpush1.bf16.msra.mxu0 0
    %453 = vmatprep.subr.bf16.mxu0 0
    %454 = vmatpush1.bf16.msra.mxu0 0
    %455 = vmatprep.subr.bf16.mxu0 0
    %456 = vmatpush1.bf16.msra.mxu0 %v437
    %457 = vmatprep.subr.bf16.mxu0 0
    %458 = vmatpush1.bf16.msra.mxu0 %v435
    %459 = vmatprep.subr.bf16.mxu0 0
    %460 = vmatpush2.bf16.msra.mxu0 0
    %461 = vmatprep.subr.bf16.mxu0 0
    %462 = vmatpush2.bf16.msra.mxu0 0
    %463 = vmatprep.subr.bf16.mxu0 0
    %464 = vmatpush2.bf16.msra.mxu0 0
    %465 = vmatprep.subr.bf16.mxu0 0
    %466 = vmatpush2.bf16.msra.mxu0 0
    %467 = vmatprep.subr.bf16.mxu0 0
    %468 = vmatpush2.bf16.msra.mxu0 0
    %469 = vmatprep.subr.bf16.mxu0 0
    %470 = vmatpush2.bf16.msra.mxu0 0
    %471 = vmatprep.subr.bf16.mxu0 0
    %472 = vmatpush2.bf16.msra.mxu0 0
    %473 = vmatprep.subr.bf16.mxu0 0
    %474 = vmatpush2.bf16.msra.mxu0 0
    %475 = vmatprep.mubr.bf16.mxu0 0
    %476 = vmatmul.mubr.bf16.gmra.mxu0 %v441
    %v477 = vpop.f32.mrf.mxu0
    %v478 = vadd.f32 %v423, %v477
    %v479 = vpop.f32.mrf.mxu0
    %v480 = vpop.f32.mrf.mxu0
    %v481 = vpop.f32.mrf.mxu0
    %482 = vdwg.mxu0
    %vm483 = vcmp.ge.f32.partialorder %v478, 0.0
    %v484 = vmul.f32 %v478, 0.01
    %v485 = vsel %vm483, %v478, %v484
    %v486 = vpack.c.bf16 %v485, %v485
    %v487 = vld [vmem:[#allocation4 + $0x4] ss:$0 sm:$0xff]
    %488 = vrot.lane.b32.xlu0 %v432, 32
    %v489 = vpop.permute.xlu0 %488
    %490 = vrot.lane.b32.xlu0 %v433, 32
    %v491 = vpop.permute.xlu0 %490
    %v495 = vsel %vm72, %v486, 0
    %497 = vmatprep.subr.bf16.mxu0 0
    %498 = vmatpush1.bf16.msra.mxu0 0
    %499 = vmatprep.subr.bf16.mxu0 0
    %500 = vmatpush1.bf16.msra.mxu0 0
    %501 = vmatprep.subr.bf16.mxu0 0
    %502 = vmatpush1.bf16.msra.mxu0 0
    %503 = vmatprep.subr.bf16.mxu0 0
    %504 = vmatpush1.bf16.msra.mxu0 0
    %505 = vmatprep.subr.bf16.mxu0 0
    %506 = vmatpush1.bf16.msra.mxu0 0
    %507 = vmatprep.subr.bf16.mxu0 0
    %508 = vmatpush1.bf16.msra.mxu0 0
    %509 = vmatprep.subr.bf16.mxu0 0
    %510 = vmatpush1.bf16.msra.mxu0 %v491
    %511 = vmatprep.subr.bf16.mxu0 0
    %512 = vmatpush1.bf16.msra.mxu0 %v489
    %513 = vmatprep.subr.bf16.mxu0 0
    %514 = vmatpush2.bf16.msra.mxu0 0
    %515 = vmatprep.subr.bf16.mxu0 0
    %516 = vmatpush2.bf16.msra.mxu0 0
    %517 = vmatprep.subr.bf16.mxu0 0
    %518 = vmatpush2.bf16.msra.mxu0 0
    %519 = vmatprep.subr.bf16.mxu0 0
    %520 = vmatpush2.bf16.msra.mxu0 0
    %521 = vmatprep.subr.bf16.mxu0 0
    %522 = vmatpush2.bf16.msra.mxu0 0
    %523 = vmatprep.subr.bf16.mxu0 0
    %524 = vmatpush2.bf16.msra.mxu0 0
    %525 = vmatprep.subr.bf16.mxu0 0
    %526 = vmatpush2.bf16.msra.mxu0 0
    %527 = vmatprep.subr.bf16.mxu0 0
    %528 = vmatpush2.bf16.msra.mxu0 0
    %529 = vmatprep.mubr.bf16.mxu0 0
    %530 = vmatmul.mubr.bf16.gmra.mxu0 %v495
    %v531 = vpop.f32.mrf.mxu0
    %v532 = vadd.f32 %v487, %v531
    %v533 = vpop.f32.mrf.mxu0
    %v534 = vpop.f32.mrf.mxu0
    %v535 = vpop.f32.mrf.mxu0
    %536 = vdwg.mxu0
    %vm537 = vcmp.ge.f32.partialorder %v532, 0.0
    %v538 = vmul.f32 %v532, 0.02
    %v539 = vsel %vm537, %v532, %v538
    %v540 = vpack.c.bf16 %v539, %v539
    %v541 = vld [vmem:[#allocation2 + $0x20] sm:$0xf]
    %v542 = vld [vmem:[#allocation2 + $0x24] sm:$0xf]
    %v543 = vld [vmem:[#allocation2 + $0x28] sm:$0xf]
    %v544 = vld [vmem:[#allocation2 + $0x2c] sm:$0xf]
    %v545 = vld [vmem:[#allocation4 + $0x5] ss:$0 sm:$0xff]
    %v550 = vunpack.c.l.b16 %v541
    %v551 = vunpack.c.l.b16 %v542
    %v552 = vunpack.c.l.b16 %v543
    %v553 = vunpack.c.l.b16 %v544
    %v554 = vpack.c.b16 %v551, %v550
    %v555 = vpack.c.b16 %v553, %v552
    %556 = vrot.lane.b32.xlu0 %v554, 64
    %v557 = vpop.permute.xlu0 %556
    %558 = vrot.lane.b32.xlu0 %v555, 64
    %v559 = vpop.permute.xlu0 %558
    %v563 = vsel %vm72, %v540, 0
    %565 = vmatprep.subr.bf16.mxu0 0
    %566 = vmatpush1.bf16.msra.mxu0 0
    %567 = vmatprep.subr.bf16.mxu0 0
    %568 = vmatpush1.bf16.msra.mxu0 0
    %569 = vmatprep.subr.bf16.mxu0 0
    %570 = vmatpush1.bf16.msra.mxu0 0
    %571 = vmatprep.subr.bf16.mxu0 0
    %572 = vmatpush1.bf16.msra.mxu0 0
    %573 = vmatprep.subr.bf16.mxu0 0
    %574 = vmatpush1.bf16.msra.mxu0 0
    %575 = vmatprep.subr.bf16.mxu0 0
    %576 = vmatpush1.bf16.msra.mxu0 0
    %577 = vmatprep.subr.bf16.mxu0 0
    %578 = vmatpush1.bf16.msra.mxu0 %v559
    %579 = vmatprep.subr.bf16.mxu0 0
    %580 = vmatpush1.bf16.msra.mxu0 %v557
    %581 = vmatprep.subr.bf16.mxu0 0
    %582 = vmatpush2.bf16.msra.mxu0 0
    %583 = vmatprep.subr.bf16.mxu0 0
    %584 = vmatpush2.bf16.msra.mxu0 0
    %585 = vmatprep.subr.bf16.mxu0 0
    %586 = vmatpush2.bf16.msra.mxu0 0
    %587 = vmatprep.subr.bf16.mxu0 0
    %588 = vmatpush2.bf16.msra.mxu0 0
    %589 = vmatprep.subr.bf16.mxu0 0
    %590 = vmatpush2.bf16.msra.mxu0 0
    %591 = vmatprep.subr.bf16.mxu0 0
    %592 = vmatpush2.bf16.msra.mxu0 0
    %593 = vmatprep.subr.bf16.mxu0 0
    %594 = vmatpush2.bf16.msra.mxu0 0
    %595 = vmatprep.subr.bf16.mxu0 0
    %596 = vmatpush2.bf16.msra.mxu0 0
    %597 = vmatprep.mubr.bf16.mxu0 0
    %598 = vmatmul.mubr.bf16.gmra.mxu0 %v563
    %v599 = vpop.f32.mrf.mxu0
    %v600 = vadd.f32 %v545, %v599
    %v601 = vpop.f32.mrf.mxu0
    %v602 = vpop.f32.mrf.mxu0
    %v603 = vpop.f32.mrf.mxu0
    %604 = vdwg.mxu0
    %vm605 = vcmp.ge.f32.partialorder %v600, 0.0
    %v606 = vmul.f32 %v600, 0.02
    %v607 = vsel %vm605, %v600, %v606
    %v608 = vpack.c.bf16 %v607, %v607
    %v609 = vld [vmem:[#allocation4 + $0x6] ss:$0 sm:$0xff]
    %610 = vrot.lane.b32.xlu0 %v554, 32
    %v611 = vpop.permute.xlu0 %610
    %612 = vrot.lane.b32.xlu0 %v555, 32
    %v613 = vpop.permute.xlu0 %612
    %v617 = vsel %vm72, %v608, 0
    %619 = vmatprep.subr.bf16.mxu0 0
    %620 = vmatpush1.bf16.msra.mxu0 0
    %621 = vmatprep.subr.bf16.mxu0 0
    %622 = vmatpush1.bf16.msra.mxu0 0
    %623 = vmatprep.subr.bf16.mxu0 0
    %624 = vmatpush1.bf16.msra.mxu0 0
    %625 = vmatprep.subr.bf16.mxu0 0
    %626 = vmatpush1.bf16.msra.mxu0 0
    %627 = vmatprep.subr.bf16.mxu0 0
    %628 = vmatpush1.bf16.msra.mxu0 0
    %629 = vmatprep.subr.bf16.mxu0 0
    %630 = vmatpush1.bf16.msra.mxu0 0
    %631 = vmatprep.subr.bf16.mxu0 0
    %632 = vmatpush1.bf16.msra.mxu0 %v613
    %633 = vmatprep.subr.bf16.mxu0 0
    %634 = vmatpush1.bf16.msra.mxu0 %v611
    %635 = vmatprep.subr.bf16.mxu0 0
    %636 = vmatpush2.bf16.msra.mxu0 0
    %637 = vmatprep.subr.bf16.mxu0 0
    %638 = vmatpush2.bf16.msra.mxu0 0
    %639 = vmatprep.subr.bf16.mxu0 0
    %640 = vmatpush2.bf16.msra.mxu0 0
    %641 = vmatprep.subr.bf16.mxu0 0
    %642 = vmatpush2.bf16.msra.mxu0 0
    %643 = vmatprep.subr.bf16.mxu0 0
    %644 = vmatpush2.bf16.msra.mxu0 0
    %645 = vmatprep.subr.bf16.mxu0 0
    %646 = vmatpush2.bf16.msra.mxu0 0
    %647 = vmatprep.subr.bf16.mxu0 0
    %648 = vmatpush2.bf16.msra.mxu0 0
    %649 = vmatprep.subr.bf16.mxu0 0
    %650 = vmatpush2.bf16.msra.mxu0 0
    %651 = vmatprep.mubr.bf16.mxu0 0
    %652 = vmatmul.mubr.bf16.gmra.mxu0 %v617
    %v653 = vpop.f32.mrf.mxu0
    %v654 = vadd.f32 %v609, %v653
    %v655 = vpop.f32.mrf.mxu0
    %v656 = vpop.f32.mrf.mxu0
    %v657 = vpop.f32.mrf.mxu0
    %658 = vdwg.mxu0
    %v659 = vxor.u32 %v654, 2147483648
    %v660 = vmul.f32 %v659, 1.442695
    %v661 = vpow.pop %v660
    %v662 = vadd.f32 %v661, 1.0
    %v663 = vrcp.pop %v662
    %v664 = vmul.f32 1.0, %v663
    %666 = vrot.lane.b32.xlu0 %v664, 32
    %v667 = vpop.permute.xlu0 %666
    %vm669 = vcmask 523520
    %670 = vst.msk [vmem:[%s5] sm:$0xff] %vm669, %v667
    // Predicated region
    $region30: #{automaton_rnn_forward.1} parent=1 // pred_check
      _
    $region31: #{automaton_rnn_forward.1} parent=1 // pred_check_branch
      %672 = sbr.rel (0) target = $region33
    $region32: #{automaton_rnn_forward.1} parent=1 // pred_region
      _
    $region33: #{automaton_rnn_forward.1} parent=1 // pred_fallthru
      _
    // Predicated region
    $region34: #{automaton_rnn_forward.1} parent=1 // pred_check
      _
    $region35: #{automaton_rnn_forward.1} parent=1 // pred_check_branch
      %674 = sbr.rel (0) target = $region37
    $region36: #{automaton_rnn_forward.1} parent=1 // pred_region
      _
    $region37: #{automaton_rnn_forward.1} parent=1 // pred_fallthru
      _
    %675 = vsyncpa [#allocation3], 1
    %676 = vsyncpa [#allocation5], 1

</llo_original>
